<compile_context>
chip_gen: v5e
topology: v5e:2x2
jax: 0.10.0
libtpu: 0.0.40
codegen_flags: <defaults>
</compile_context>

<pallas_src>
import math

import jax
import jax.numpy as jnp
from jax.experimental import pallas as pl
from jax.experimental.pallas import tpu as pltpu


# ---------------------------------------------------------------------------
# Kernel 1: conv1d (im2col matmul) + ReLU + per-channel sum / sum-of-squares.
# grid = (nsplit, batch_blocks); stats blocks are resident across the inner axis.
# ---------------------------------------------------------------------------
def conv_relu_stats_kernel(xp_ref, w_ref, y_ref, sum_ref, sq_ref, cols_ref):
    # xp_ref:   (BB, T_pad, C_in)   bf16 padded input slab
    # w_ref:    (K*C_in, C_out)     bf16 weight, rows ordered (k, c_in)
    # y_ref:    (BB, T_out, C_out)  bf16 conv+relu output
    # sum_ref:  (1, 1, C_out)       f32 running sum      (per parallel split)
    # sq_ref:   (1, 1, C_out)       f32 running sum-of-squares
    # cols_ref: (BB*T_out, K*C_in)  bf16 im2col scratch
    i = pl.program_id(1)
    BB, _, C_in = xp_ref.shape
    _, T_out, C_out = y_ref.shape
    K = w_ref.shape[0] // C_in

    xp = xp_ref[...]
    # Build im2col: tap k occupies columns [k*C_in, (k+1)*C_in).  K is small and
    # static, so this unrolls into a few narrow lane-slice stores.
    for k in range(K):
        cols_ref[:, k * C_in:(k + 1) * C_in] = (
            xp[:, k:k + T_out, :].reshape(BB * T_out, C_in))

    # Single MXU matmul, bf16 x bf16 -> f32 accumulation.
    acc = jnp.dot(cols_ref[...], w_ref[...], preferred_element_type=jnp.float32)
    y = jnp.maximum(acc, 0.0)  # ReLU applied BEFORE batchnorm, as in the module
    y_ref[...] = y.reshape(BB, T_out, C_out).astype(y_ref.dtype)

    @pl.when(i == 0)
    def _():
        sum_ref[...] = jnp.zeros_like(sum_ref)
        sq_ref[...] = jnp.zeros_like(sq_ref)

    # Stats from the f32 accumulator (before the bf16 downcast).
    sum_ref[...] += jnp.sum(y, axis=0, keepdims=True).reshape(1, 1, C_out)
    sq_ref[...] += jnp.sum(y * y, axis=0, keepdims=True).reshape(1, 1, C_out)


# ---------------------------------------------------------------------------
# Kernel 2: lane-dense elementwise normalization  out = y * scale + shift
# (scale/shift already fold mean, var, gamma, beta; tiled to the wide view).
# ---------------------------------------------------------------------------
def normalize_kernel(y_ref, scale_ref, shift_ref, o_ref):
    o_ref[...] = (y_ref[...].astype(jnp.float32) * scale_ref[...]
                  + shift_ref[...]).astype(o_ref.dtype)


# ---------------------------------------------------------------------------
# Small host-side helpers (all trace-time Python ints)
# ---------------------------------------------------------------------------
def _largest_divisor_within(n, cap):
    best = 1
    for d in range(1, n + 1):
        if n % d == 0 and d <= cap:
            best = d
    return best


def _pick_row_block(nr, row_bytes, target_bytes=4 << 20):
    cap = max(1, target_bytes // row_bytes)
    best = None
    for d in range(1, nr + 1):
        if nr % d == 0 and d <= cap and (d % 8 == 0 or d == nr):
            best = d
    return best if best is not None else nr


# ---------------------------------------------------------------------------
# Wrapper
# ---------------------------------------------------------------------------
def batchnorm_conv(x, w, gamma, beta, eps=1e-5):
    """x: (B, T, C_in); w: (C_out, C_in, K) (PyTorch Conv1d weight layout)."""
    B, T, C_in = x.shape
    C_out, _, K = w.shape
    pad = K // 2
    T_pad = T + 2 * pad
    T_out = T_pad - K + 1  # == T for odd K (matches PyTorch padding=K//2)

    # Pad once, already in bf16, so the extra HBM copy is half width.
    xp = jnp.pad(x.astype(jnp.bfloat16), ((0, 0), (pad, pad), (0, 0)))
    # (C_out, C_in, K) -> (K, C_in, C_out) -> (K*C_in, C_out); rows ordered (k, c)
    # to match the im2col column ordering inside the kernel.
    wk = jnp.transpose(w, (2, 1, 0)).reshape(K * C_in, C_out).astype(jnp.bfloat16)

    # ----- pass 1: conv + relu + batch stats --------------------------------
    nsplit = 2 if (B % 2 == 0 and B >= 2) else 1   # v7x: one split per TensorCore
    b_split = B // nsplit
    per_batch_bytes = (T_pad * C_in + T_out * C_out) * 2  # bf16 in + bf16 out
    bb_cap = max(1, (4 << 20) // per_batch_bytes)          # ~4 MiB per block set
    BB = _largest_divisor_within(b_split, bb_cap)
    nb_inner = b_split // BB

    flops1 = 2 * B * T_out * K * C_in * C_out
    bytes1 = (xp.size * 2 + wk.size * 2 + B * T_out * C_out * 2
              + 2 * nsplit * C_out * 4)

    y, ssum, ssq = pl.pallas_call(
        conv_relu_stats_kernel,
        out_shape=(
            jax.ShapeDtypeStruct((B, T_out, C_out), jnp.bfloat16),
            jax.ShapeDtypeStruct((nsplit, 1, C_out), jnp.float32),
            jax.ShapeDtypeStruct((nsplit, 1, C_out), jnp.float32),
        ),
        grid_spec=pltpu.PrefetchScalarGridSpec(
            num_scalar_prefetch=0,
            grid=(nsplit, nb_inner),
            in_specs=[
                pl.BlockSpec((BB, T_pad, C_in),
                             lambda p, i: (p * nb_inner + i, 0, 0)),
                pl.BlockSpec((K * C_in, C_out), lambda p, i: (0, 0)),
            ],
            out_specs=(
                pl.BlockSpec((BB, T_out, C_out),
                             lambda p, i: (p * nb_inner + i, 0, 0)),
                pl.BlockSpec((1, 1, C_out), lambda p, i: (p, 0, 0)),  # resident
                pl.BlockSpec((1, 1, C_out), lambda p, i: (p, 0, 0)),  # resident
            ),
            scratch_shapes=[pltpu.VMEM((BB * T_out, K * C_in), jnp.bfloat16)],
        ),
        compiler_params=pltpu.CompilerParams(
            dimension_semantics=("parallel", "arbitrary")),
        cost_estimate=pl.CostEstimate(
            flops=flops1, transcendentals=0, bytes_accessed=bytes1),
    )(xp, wk)

    # ----- fold batch statistics + affine params into scale/shift ----------
    n = B * T_out
    mean = jnp.sum(ssum, axis=0)[0] / n
    var = jnp.maximum(jnp.sum(ssq, axis=0)[0] / n - mean * mean, 0.0)  # biased var
    scale = gamma / jnp.sqrt(var + eps)
    shift = beta - mean * scale

    # ----- pass 2: lane-dense elementwise normalize -------------------------
    # View y as (rows, R*C_out) with R*C_out a multiple of 128 so stores are
    # full-lane; the reshapes outside the kernels are contiguous (free).
    total_rows = B * T_out
    base = 128 // math.gcd(C_out, 128)
    if total_rows % base == 0:
        R = base
        while total_rows % (2 * R) == 0 and 2 * R * C_out <= 2048:
            R *= 2
    else:
        R = 1  # fallback: keep (rows, C_out) layout
    WIDE = R * C_out
    NR = total_rows // R
    RB = _pick_row_block(NR, WIDE * (2 + 4))  # bf16 read + f32 write per row

    y2 = y.reshape(NR, WIDE)
    scale_t = jnp.tile(scale, R).reshape(1, WIDE).astype(jnp.float32)
    shift_t = jnp.tile(shift, R).reshape(1, WIDE).astype(jnp.float32)

    flops2 = 2 * NR * WIDE
    bytes2 = NR * WIDE * (2 + 4) + 2 * WIDE * 4

    out2 = pl.pallas_call(
        normalize_kernel,
        out_shape=jax.ShapeDtypeStruct((NR, WIDE), jnp.float32),
        grid_spec=pltpu.PrefetchScalarGridSpec(
            num_scalar_prefetch=0,
            grid=(NR // RB,),
            in_specs=[
                pl.BlockSpec((RB, WIDE), lambda r: (r, 0)),
                pl.BlockSpec((1, WIDE), lambda r: (0, 0)),
                pl.BlockSpec((1, WIDE), lambda r: (0, 0)),
            ],
            out_specs=pl.BlockSpec((RB, WIDE), lambda r: (r, 0)),
        ),
        compiler_params=pltpu.CompilerParams(
            dimension_semantics=("parallel",)),
        cost_estimate=pl.CostEstimate(
            flops=flops2, transcendentals=0, bytes_accessed=bytes2),
    )(y2, scale_t, shift_t)

    return out2.reshape(B, T_out, C_out)


# ---------------------------------------------------------------------------
# Pure-JAX reference (mirrors the PyTorch module: NCL conv + train-mode BN)
# ---------------------------------------------------------------------------
def reference(x, w, gamma, beta, eps=1e-5):
    K = w.shape[2]
    xt = jnp.transpose(x, (0, 2, 1))  # (B, C_in, T)  == x.transpose(1, 2)
    y = jax.lax.conv_general_dilated(
        xt, w, window_strides=(1,), padding=[(K // 2, K // 2)],
        dimension_numbers=("NCH", "OIH", "NCH"),
        precision=jax.lax.Precision.HIGHEST,
    )
    y = jnp.maximum(y, 0.0)
    mean = jnp.mean(y, axis=(0, 2), keepdims=True)
    var = jnp.mean((y - mean) ** 2, axis=(0, 2), keepdims=True)
    y = (y - mean) / jnp.sqrt(var + eps) * gamma[None, :, None] + beta[None, :, None]
    return jnp.transpose(y, (0, 2, 1))


if __name__ == "__main__":
    B, T, C_in, C_out, K = 2, 16, 8, 16, 5

    key = jax.random.PRNGKey(0)
    kx, kw, kg, kb = jax.random.split(key, 4)
    x = jax.random.normal(kx, (B, T, C_in), dtype=jnp.float32)
    w = jax.random.normal(kw, (C_out, C_in, K), dtype=jnp.float32) * 0.1
    gamma = 1.0 + 0.1 * jax.random.normal(kg, (C_out,), dtype=jnp.float32)
    beta = 0.1 * jax.random.normal(kb, (C_out,), dtype=jnp.float32)

    out = jax.jit(batchnorm_conv)(x, w, gamma, beta)
    out = jax.block_until_ready(out)
    assert out.shape == (B, T, C_out), out.shape

    # Tight check vs. a reference fed the same bf16-rounded conv inputs
    # (isolates the intentional bf16 quantization from kernel math errors).
    x_q = x.astype(jnp.bfloat16).astype(jnp.float32)
    w_q = w.astype(jnp.bfloat16).astype(jnp.float32)
    ref_q = jax.block_until_ready(reference(x_q, w_q, gamma, beta))
    err_q = float(jnp.max(jnp.abs(out - ref_q)))
    assert jnp.allclose(out, ref_q, atol=3e-2, rtol=3e-2), err_q

    # Loose sanity check vs. the pure-f32 reference (bf16 MXU inputs + bf16 y).
    ref = jax.block_until_ready(reference(x, w, gamma, beta))
    err = float(jnp.max(jnp.abs(out - ref)))
    assert jnp.allclose(out, ref, atol=1e-1, rtol=1e-1), err

    print("KERNEL_OK")
</pallas_src>

<mosaic_0001>
module attributes {stable_mosaic.version = 11 : i64} {
  func.func @normalize_kernel(%arg0: i32, %arg1: memref<1x512xbf16, #tpu.memory_space<vmem>>, %arg2: memref<1x512xf32, #tpu.memory_space<vmem>>, %arg3: memref<1x512xf32, #tpu.memory_space<vmem>>, %arg4: memref<1x512xf32, #tpu.memory_space<vmem>>) attributes {dimension_semantics = [#tpu.dimension_semantics<parallel>], iteration_bounds = array<i64: 1>, scalar_prefetch = 0 : i64, scratch_operands = 0 : i64, tpu.core_type = #tpu.core_type<tc>, window_params = [{transform_indices = @transform_0, window_bounds = array<i64: 1, 512>}, {pipeline_mode = #tpu.pipeline_mode<synchronous>, transform_indices = @transform_1, window_bounds = array<i64: 1, 512>}, {pipeline_mode = #tpu.pipeline_mode<synchronous>, transform_indices = @transform_2, window_bounds = array<i64: 1, 512>}, {transform_indices = @transform_3, window_bounds = array<i64: 1, 512>}]} {
    %c0 = arith.constant 0 : index
    %c0_0 = arith.constant 0 : index
    %0 = vector.load %arg1[%c0, %c0_0] : memref<1x512xbf16, #tpu.memory_space<vmem>>, vector<1x512xbf16>
    %1 = arith.extf %0 : vector<1x512xbf16> to vector<1x512xf32>
    %c0_1 = arith.constant 0 : index
    %c0_2 = arith.constant 0 : index
    %2 = vector.load %arg2[%c0_1, %c0_2] : memref<1x512xf32, #tpu.memory_space<vmem>>, vector<1x512xf32>
    %3 = arith.mulf %1, %2 : vector<1x512xf32>
    %c0_3 = arith.constant 0 : index
    %c0_4 = arith.constant 0 : index
    %4 = vector.load %arg3[%c0_3, %c0_4] : memref<1x512xf32, #tpu.memory_space<vmem>>, vector<1x512xf32>
    %5 = arith.addf %3, %4 : vector<1x512xf32>
    %c0_5 = arith.constant 0 : index
    %c0_6 = arith.constant 0 : index
    %6 = vector.load %arg4[%c0_5, %c0_6] : memref<1x512xf32, #tpu.memory_space<vmem>>, vector<1x512xf32>
    tpu.vector_store %arg4[%c0_5, %c0_6], %5 {strides = array<i32>} : memref<1x512xf32, #tpu.memory_space<vmem>>, vector<1x512xf32>,
    return
  }
  func.func @transform_0(%arg0: i32) -> (i32, i32) {
    %c0_i32 = arith.constant 0 : i32
    %c0_i32_0 = arith.constant 0 : i32
    return %arg0, %c0_i32 : i32, i32
  }
  func.func @transform_1(%arg0: i32) -> (i32, i32) {
    %c0_i32 = arith.constant 0 : i32
    %c0_i32_0 = arith.constant 0 : i32
    %c0_i32_1 = arith.constant 0 : i32
    return %c0_i32, %c0_i32_0 : i32, i32
  }
  func.func @transform_2(%arg0: i32) -> (i32, i32) {
    %c0_i32 = arith.constant 0 : i32
    %c0_i32_0 = arith.constant 0 : i32
    %c0_i32_1 = arith.constant 0 : i32
    return %c0_i32, %c0_i32_0 : i32, i32
  }
  func.func @transform_3(%arg0: i32) -> (i32, i32) {
    %c0_i32 = arith.constant 0 : i32
    %c0_i32_0 = arith.constant 0 : i32
    return %arg0, %c0_i32 : i32, i32
  }
}

module attributes {stable_mosaic.version = 11 : i64} {
  func.func @conv_relu_stats_kernel(%arg0: i32, %arg1: i32, %arg2: memref<1x20x8xbf16, #tpu.memory_space<vmem>>, %arg3: memref<40x16xbf16, #tpu.memory_space<vmem>>, %arg4: memref<1x16x16xbf16, #tpu.memory_space<vmem>>, %arg5: memref<1x1x16xf32, #tpu.memory_space<vmem>>, %arg6: memref<1x1x16xf32, #tpu.memory_space<vmem>>, %arg7: memref<16x40xbf16, #tpu.memory_space<vmem>>) attributes {dimension_semantics = [#tpu.dimension_semantics<parallel>, #tpu.dimension_semantics<arbitrary>], iteration_bounds = array<i64: 2, 1>, scalar_prefetch = 0 : i64, scratch_operands = 1 : i64, tpu.core_type = #tpu.core_type<tc>, window_params = [{transform_indices = @transform_0, window_bounds = array<i64: 1, 20, 8>}, {pipeline_mode = #tpu.pipeline_mode<synchronous>, transform_indices = @transform_1, window_bounds = array<i64: 40, 16>}, {transform_indices = @transform_2, window_bounds = array<i64: 1, 16, 16>}, {transform_indices = @transform_3, window_bounds = array<i64: 1, 1, 16>}, {transform_indices = @transform_4, window_bounds = array<i64: 1, 1, 16>}]} {
    %c0 = arith.constant 0 : index
    %c0_0 = arith.constant 0 : index
    %c0_1 = arith.constant 0 : index
    %0 = vector.load %arg2[%c0, %c0_0, %c0_1] : memref<1x20x8xbf16, #tpu.memory_space<vmem>>, vector<1x20x8xbf16>
    %1 = vector.extract_strided_slice %0 {offsets = [0, 0, 0], sizes = [1, 16, 8], strides = [1, 1, 1]} : vector<1x20x8xbf16> to vector<1x16x8xbf16>
    %2 = vector.shape_cast %1 : vector<1x16x8xbf16> to vector<16x8xbf16>
    %c0_2 = arith.constant 0 : index
    %c0_3 = arith.constant 0 : index
    %3 = vector.load %arg7[%c0_2, %c0_3] : memref<16x40xbf16, #tpu.memory_space<vmem>>, vector<16x8xbf16>
    tpu.vector_store %arg7[%c0_2, %c0_3], %2 {strides = array<i32>} : memref<16x40xbf16, #tpu.memory_space<vmem>>, vector<16x8xbf16>,
    %4 = vector.extract_strided_slice %0 {offsets = [0, 1, 0], sizes = [1, 16, 8], strides = [1, 1, 1]} : vector<1x20x8xbf16> to vector<1x16x8xbf16>
    %5 = vector.shape_cast %4 : vector<1x16x8xbf16> to vector<16x8xbf16>
    %c0_4 = arith.constant 0 : index
    %c8 = arith.constant 8 : index
    %6 = vector.load %arg7[%c0_4, %c8] : memref<16x40xbf16, #tpu.memory_space<vmem>>, vector<16x8xbf16>
    tpu.vector_store %arg7[%c0_4, %c8], %5 {strides = array<i32>} : memref<16x40xbf16, #tpu.memory_space<vmem>>, vector<16x8xbf16>,
    %7 = vector.extract_strided_slice %0 {offsets = [0, 2, 0], sizes = [1, 16, 8], strides = [1, 1, 1]} : vector<1x20x8xbf16> to vector<1x16x8xbf16>
    %8 = vector.shape_cast %7 : vector<1x16x8xbf16> to vector<16x8xbf16>
    %c0_5 = arith.constant 0 : index
    %c16 = arith.constant 16 : index
    %9 = vector.load %arg7[%c0_5, %c16] : memref<16x40xbf16, #tpu.memory_space<vmem>>, vector<16x8xbf16>
    tpu.vector_store %arg7[%c0_5, %c16], %8 {strides = array<i32>} : memref<16x40xbf16, #tpu.memory_space<vmem>>, vector<16x8xbf16>,
    %10 = vector.extract_strided_slice %0 {offsets = [0, 3, 0], sizes = [1, 16, 8], strides = [1, 1, 1]} : vector<1x20x8xbf16> to vector<1x16x8xbf16>
    %11 = vector.shape_cast %10 : vector<1x16x8xbf16> to vector<16x8xbf16>
    %c0_6 = arith.constant 0 : index
    %c24 = arith.constant 24 : index
    %12 = vector.load %arg7[%c0_6, %c24] : memref<16x40xbf16, #tpu.memory_space<vmem>>, vector<16x8xbf16>
    tpu.vector_store %arg7[%c0_6, %c24], %11 {strides = array<i32>} : memref<16x40xbf16, #tpu.memory_space<vmem>>, vector<16x8xbf16>,
    %13 = vector.extract_strided_slice %0 {offsets = [0, 4, 0], sizes = [1, 16, 8], strides = [1, 1, 1]} : vector<1x20x8xbf16> to vector<1x16x8xbf16>
    %14 = vector.shape_cast %13 : vector<1x16x8xbf16> to vector<16x8xbf16>
    %c0_7 = arith.constant 0 : index
    %c32 = arith.constant 32 : index
    %15 = vector.load %arg7[%c0_7, %c32] : memref<16x40xbf16, #tpu.memory_space<vmem>>, vector<16x8xbf16>
    tpu.vector_store %arg7[%c0_7, %c32], %14 {strides = array<i32>} : memref<16x40xbf16, #tpu.memory_space<vmem>>, vector<16x8xbf16>,
    %c0_8 = arith.constant 0 : index
    %c0_9 = arith.constant 0 : index
    %16 = vector.load %arg7[%c0_8, %c0_9] : memref<16x40xbf16, #tpu.memory_space<vmem>>, vector<16x40xbf16>
    %c0_10 = arith.constant 0 : index
    %c0_11 = arith.constant 0 : index
    %17 = vector.load %arg3[%c0_10, %c0_11] : memref<40x16xbf16, #tpu.memory_space<vmem>>, vector<40x16xbf16>
    %cst = arith.constant dense<0.000000e+00> : vector<16x16xf32>
    %18 = tpu.matmul %16, %17, %cst {dimension_numbers = #tpu.dot_dimension_numbers<[1], [0], [0], [1], [0, 0, 1, 1], [], []>} : vector<16x40xbf16>, vector<40x16xbf16>, vector<16x16xf32> -> vector<16x16xf32>
    %cst_12 = arith.constant 0.000000e+00 : f32
    %19 = vector.broadcast %cst_12 : f32 to vector<16x16xf32>
    %20 = arith.maximumf %18, %19 : vector<16x16xf32>
    %21 = vector.shape_cast %20 : vector<16x16xf32> to vector<1x16x16xf32>
    %22 = arith.truncf %21 : vector<1x16x16xf32> to vector<1x16x16xbf16>
    %c0_13 = arith.constant 0 : index
    %c0_14 = arith.constant 0 : index
    %c0_15 = arith.constant 0 : index
    %23 = vector.load %arg4[%c0_13, %c0_14, %c0_15] : memref<1x16x16xbf16, #tpu.memory_space<vmem>>, vector<1x16x16xbf16>
    tpu.vector_store %arg4[%c0_13, %c0_14, %c0_15], %22 {strides = array<i32>} : memref<1x16x16xbf16, #tpu.memory_space<vmem>>, vector<1x16x16xbf16>,
    %c0_i32 = arith.constant 0 : i32
    %24 = arith.cmpi eq, %arg1, %c0_i32 : i32
    %25 = arith.extui %24 : i1 to i32
    %c0_i32_16 = arith.constant 0 : i32
    %26 = arith.cmpi ne, %25, %c0_i32_16 : i32
    scf.if %26 {
      %cst_31 = arith.constant 0.000000e+00 : f32
      %40 = vector.broadcast %cst_31 : f32 to vector<1x1x16xf32>
      %c0_32 = arith.constant 0 : index
      %c0_33 = arith.constant 0 : index
      %c0_34 = arith.constant 0 : index
      %41 = vector.load %arg5[%c0_32, %c0_33, %c0_34] : memref<1x1x16xf32, #tpu.memory_space<vmem>>, vector<1x1x16xf32>
      tpu.vector_store %arg5[%c0_32, %c0_33, %c0_34], %40 {strides = array<i32>} : memref<1x1x16xf32, #tpu.memory_space<vmem>>, vector<1x1x16xf32>,
      %cst_35 = arith.constant 0.000000e+00 : f32
      %42 = vector.broadcast %cst_35 : f32 to vector<1x1x16xf32>
      %c0_36 = arith.constant 0 : index
      %c0_37 = arith.constant 0 : index
      %c0_38 = arith.constant 0 : index
      %43 = vector.load %arg6[%c0_36, %c0_37, %c0_38] : memref<1x1x16xf32, #tpu.memory_space<vmem>>, vector<1x1x16xf32>
      tpu.vector_store %arg6[%c0_36, %c0_37, %c0_38], %42 {strides = array<i32>} : memref<1x1x16xf32, #tpu.memory_space<vmem>>, vector<1x1x16xf32>,
    } else {
    }
    %c0_17 = arith.constant 0 : index
    %c0_18 = arith.constant 0 : index
    %c0_19 = arith.constant 0 : index
    %27 = vector.load %arg5[%c0_17, %c0_18, %c0_19] : memref<1x1x16xf32, #tpu.memory_space<vmem>>, vector<1x1x16xf32>
    %cst_20 = arith.constant dense<0.000000e+00> : vector<16xf32>
    %28 = vector.multi_reduction <add>, %20, %cst_20 [0] : vector<16x16xf32> to vector<16xf32>
    %29 = vector.shape_cast %28 : vector<16xf32> to vector<1x16xf32>
    %30 = vector.shape_cast %29 : vector<1x16xf32> to vector<1x1x16xf32>
    %31 = arith.addf %27, %30 : vector<1x1x16xf32>
    %c0_21 = arith.constant 0 : index
    %c0_22 = arith.constant 0 : index
    %c0_23 = arith.constant 0 : index
    %32 = vector.load %arg5[%c0_21, %c0_22, %c0_23] : memref<1x1x16xf32, #tpu.memory_space<vmem>>, vector<1x1x16xf32>
    tpu.vector_store %arg5[%c0_21, %c0_22, %c0_23], %31 {strides = array<i32>} : memref<1x1x16xf32, #tpu.memory_space<vmem>>, vector<1x1x16xf32>,
    %c0_24 = arith.constant 0 : index
    %c0_25 = arith.constant 0 : index
    %c0_26 = arith.constant 0 : index
    %33 = vector.load %arg6[%c0_24, %c0_25, %c0_26] : memref<1x1x16xf32, #tpu.memory_space<vmem>>, vector<1x1x16xf32>
    %34 = arith.mulf %20, %20 : vector<16x16xf32>
    %cst_27 = arith.constant dense<0.000000e+00> : vector<16xf32>
    %35 = vector.multi_reduction <add>, %34, %cst_27 [0] : vector<16x16xf32> to vector<16xf32>
    %36 = vector.shape_cast %35 : vector<16xf32> to vector<1x16xf32>
    %37 = vector.shape_cast %36 : vector<1x16xf32> to vector<1x1x16xf32>
    %38 = arith.addf %33, %37 : vector<1x1x16xf32>
    %c0_28 = arith.constant 0 : index
    %c0_29 = arith.constant 0 : index
    %c0_30 = arith.constant 0 : index
    %39 = vector.load %arg6[%c0_28, %c0_29, %c0_30] : memref<1x1x16xf32, #tpu.memory_space<vmem>>, vector<1x1x16xf32>
    tpu.vector_store %arg6[%c0_28, %c0_29, %c0_30], %38 {strides = array<i32>} : memref<1x1x16xf32, #tpu.memory_space<vmem>>, vector<1x1x16xf32>,
    return
  }
  func.func @transform_0(%arg0: i32, %arg1: i32) -> (i32, i32, i32) {
    %c1_i32 = arith.constant 1 : i32
    %0 = arith.muli %arg0, %c1_i32 : i32
    %1 = arith.addi %0, %arg1 : i32
    %c0_i32 = arith.constant 0 : i32
    %c0_i32_0 = arith.constant 0 : i32
    %c0_i32_1 = arith.constant 0 : i32
    return %1, %c0_i32, %c0_i32_0 : i32, i32, i32
  }
  func.func @transform_1(%arg0: i32, %arg1: i32) -> (i32, i32) {
    %c0_i32 = arith.constant 0 : i32
    %c0_i32_0 = arith.constant 0 : i32
    %c0_i32_1 = arith.constant 0 : i32
    return %c0_i32, %c0_i32_0 : i32, i32
  }
  func.func @transform_2(%arg0: i32, %arg1: i32) -> (i32, i32, i32) {
    %c1_i32 = arith.constant 1 : i32
    %0 = arith.muli %arg0, %c1_i32 : i32
    %1 = arith.addi %0, %arg1 : i32
    %c0_i32 = arith.constant 0 : i32
    %c0_i32_0 = arith.constant 0 : i32
    %c0_i32_1 = arith.constant 0 : i32
    return %1, %c0_i32, %c0_i32_0 : i32, i32, i32
  }
  func.func @transform_3(%arg0: i32, %arg1: i32) -> (i32, i32, i32) {
    %c0_i32 = arith.constant 0 : i32
    %c0_i32_0 = arith.constant 0 : i32
    %c0_i32_1 = arith.constant 0 : i32
    return %arg0, %c0_i32, %c0_i32_0 : i32, i32, i32
  }
  func.func @transform_4(%arg0: i32, %arg1: i32) -> (i32, i32, i32) {
    %c0_i32 = arith.constant 0 : i32
    %c0_i32_0 = arith.constant 0 : i32
    %c0_i32_1 = arith.constant 0 : i32
    return %arg0, %c0_i32, %c0_i32_0 : i32, i32, i32
  }
}

</mosaic_0001>

<llo_original>
// kernel: tile.13
$region0: #{tile.13}
  #allocation0 [shape = 's32[1]{0}', space=sflag, size = 0x4, scoped, tag = 'scoped memory for tile.13']
  %s0 = inlined_call_operand.vmem [shape: f32[16], index: 0, kind: input, shape index: {}]
  %s1 = inlined_call_operand.vmem [shape: f32[32,16], index: 1, kind: output, shape index: {}]
  // Predicated region
  $region2: #{tile.13} parent=0 // pred_check
    _
  $region3: #{tile.13} parent=0 // pred_check_branch
    %3 = sbr.rel (0) target = $region5
  $region4: #{tile.13} parent=0 // pred_region
    _
  $region5: #{tile.13} parent=0 // pred_fallthru
    _
  %v4 = vld [vmem:[%s0] ss:$0 sm:$0xff]
  %5 = vst [vmem:[%s1] sm:$0xff] %v4
  %s6 = scalar_lea.vmem %s1, 8
  %7 = vst [vmem:[%s6] sm:$0xff] %v4
  %s8 = scalar_lea.vmem %s1, 16
  %9 = vst [vmem:[%s8] sm:$0xff] %v4
  %s10 = scalar_lea.vmem %s1, 24
  %11 = vst [vmem:[%s10] sm:$0xff] %v4

// kernel: tile.14
$region0: #{tile.14}
  %s0 = inlined_call_operand.vmem [shape: f32[32,16], index: 0, kind: input, shape index: {}]
  %s1 = inlined_call_operand.vmem [shape: f32[1,512], index: 1, kind: output, shape index: {}]
  $region1: #{tile.14} parent=0
    #allocation0 [shape = 'u8[16384]{0}', space=vmem, size = 0x4000, scoped, tag = 'scoped mem for output reshape']
    %v2 = vld [vmem:[%s0] ss:$8 sm:$0xf]
    %vm3 = vcmask 130048
    %4 = vst.msk [vmem:[#allocation0] ss:$8 sm:$0xf] %vm3, %v2
    %s5 = scalar_lea.vmem %s0, 7
    %v6 = vld [vmem:[%s5] ss:$8 sm:$0xf]
    %7 = vrot.lane.b32.xlu0 %v6, 112
    %v8 = vpop.permute.xlu0 %7
    %vm9 = vcmask 1048448
    %10 = vst.msk [vmem:[#allocation0] ss:$8 sm:$0xf] %vm9, %v8
    %s11 = scalar_lea.vmem %s0, 6
    %v12 = vld [vmem:[%s11] ss:$8 sm:$0xf]
    %13 = vrot.lane.b32.xlu0 %v12, 96
    %v14 = vpop.permute.xlu0 %13
    %vm15 = vcmask 917248
    %16 = vst.msk [vmem:[#allocation0] ss:$8 sm:$0xf] %vm15, %v14
    %s17 = scalar_lea.vmem %s0, 5
    %v18 = vld [vmem:[%s17] ss:$8 sm:$0xf]
    %19 = vrot.lane.b32.xlu0 %v18, 80
    %v20 = vpop.permute.xlu0 %19
    %vm21 = vcmask 786048
    %22 = vst.msk [vmem:[#allocation0] ss:$8 sm:$0xf] %vm21, %v20
    %s23 = scalar_lea.vmem %s0, 4
    %v24 = vld [vmem:[%s23] ss:$8 sm:$0xf]
    %25 = vrot.lane.b32.xlu0 %v24, 64
    %v26 = vpop.permute.xlu0 %25
    %vm27 = vcmask 654848
    %28 = vst.msk [vmem:[#allocation0] ss:$8 sm:$0xf] %vm27, %v26
    %s29 = scalar_lea.vmem %s0, 3
    %v30 = vld [vmem:[%s29] ss:$8 sm:$0xf]
    %31 = vrot.lane.b32.xlu0 %v30, 48
    %v32 = vpop.permute.xlu0 %31
    %vm33 = vcmask 523648
    %34 = vst.msk [vmem:[#allocation0] ss:$8 sm:$0xf] %vm33, %v32
    %s35 = scalar_lea.vmem %s0, 2
    %v36 = vld [vmem:[%s35] ss:$8 sm:$0xf]
    %37 = vrot.lane.b32.xlu0 %v36, 32
    %v38 = vpop.permute.xlu0 %37
    %vm39 = vcmask 392448
    %40 = vst.msk [vmem:[#allocation0] ss:$8 sm:$0xf] %vm39, %v38
    %s41 = scalar_lea.vmem %s0, 1
    %v42 = vld [vmem:[%s41] ss:$8 sm:$0xf]
    %43 = vrot.lane.b32.xlu0 %v42, 16
    %v44 = vpop.permute.xlu0 %43
    %vm45 = vcmask 261248
    %46 = vst.msk [vmem:[#allocation0] ss:$8 sm:$0xf] %vm45, %v44
    %s48 = ssub.s32 2, 1
    %v49 = vld [vmem:[#allocation0] sm:%s48]
    %s51 = ssub.s32 2, 1
    %52 = vst [vmem:[%s1] sm:%s51] %v49
    %s53 = scalar_lea.vmem [#allocation0], 8
    %v54 = vld [vmem:[%s53] sm:%s48]
    %s56 = ssub.s32 2, 1
    %s57 = scalar_lea.vmem %s1, 1
    %58 = vst [vmem:[%s57] sm:%s56] %v54
    %s59 = scalar_lea.vmem [#allocation0], 16
    %v60 = vld [vmem:[%s59] sm:%s48]
    %s62 = ssub.s32 2, 1
    %s63 = scalar_lea.vmem %s1, 2
    %64 = vst [vmem:[%s63] sm:%s62] %v60
    %s65 = scalar_lea.vmem [#allocation0], 24
    %v66 = vld [vmem:[%s65] sm:%s48]
    %s68 = ssub.s32 2, 1
    %s69 = scalar_lea.vmem %s1, 3
    %70 = vst [vmem:[%s69] sm:%s68] %v66

// kernel: batchnorm_conv.3
$region0: #{batchnorm_conv.3}
  #allocation0 [shape = 'u32[]', space=smem, size = 0x4, offset = 0x4, fixed_abs, tag = 'smem constant byte address 0x4 - core index']
  #allocation1 [shape = 'u32[72,128]{1,0:T(1,128)}', space=vmem, size = 0x9000, scoped, tag = 'internal scratch']
  %s0 = inlined_call_operand.vmem [shape: bf16[1,512], index: 0, kind: input, shape index: {}]
  %s1 = inlined_call_operand.vmem [shape: f32[1,512], index: 1, kind: input, shape index: {}]
  %s2 = inlined_call_operand.vmem [shape: f32[1,512], index: 2, kind: input, shape index: {}]
  %s3 = inlined_call_operand.vmem [shape: f32[1,512], index: 3, kind: output, shape index: {}]
  %s4 = sld [smem:[#allocation0]]
  $region22: #{batchnorm_conv.3} parent=0
    _
  %s6 = ssub.s32 1, %s4
  %s7 = scalar_select 0, %s6, %s4
  // Predicated region
  $region2: #{batchnorm_conv.3} parent=0 // pred_check
    _
  $region3: #{batchnorm_conv.3} parent=0 // pred_check_branch
    %9 = sbr.rel (0) target = $region5
  $region4: #{batchnorm_conv.3} parent=0 // pred_region
    _
  $region5: #{batchnorm_conv.3} parent=0 // pred_fallthru
    _
  // Predicated region
  $region6: #{batchnorm_conv.3} parent=0 // pred_check
    _
  $region7: #{batchnorm_conv.3} parent=0 // pred_check_branch
    %11 = sbr.rel (0) target = $region9
  $region8: #{batchnorm_conv.3} parent=0 // pred_region
    _
  $region9: #{batchnorm_conv.3} parent=0 // pred_fallthru
    _
  // Predicated region
  $region10: #{batchnorm_conv.3} parent=0 // pred_check
    _
  $region11: #{batchnorm_conv.3} parent=0 // pred_check_branch
    %13 = sbr.rel (0) target = $region13
  $region12: #{batchnorm_conv.3} parent=0 // pred_region
    _
  $region13: #{batchnorm_conv.3} parent=0 // pred_fallthru
    _
  %v14 = vld [vmem:[%s0] sm:$0xf]
  %v15 = vunpack.c.l.bf16 %v14
  %v16 = vld [vmem:[%s1] sm:$0xf]
  %v19 = vunpack.c.l.s4 857870592
  %v20 = vunpack.c.0.s8 %v19
  %v21 = vperm.slane %v16, %v20
  %v23 = vmul.f32 %v15, %v21
  %v24 = vld [vmem:[%s2] sm:$0xf]
  %v27 = vunpack.c.l.s4 857870592
  %v28 = vunpack.c.0.s8 %v27
  %v29 = vperm.slane %v24, %v28
  %v31 = vadd.f32 %v23, %v29
  %v33 = vrot.slane %v31, 1
  %v34 = vrot.slane %v31, 2
  %v35 = vrot.slane %v31, 3
  %vm36 = vcmask 1040384
  %v37 = vsel %vm36, %v31, %v33
  %vm38 = vcmask 1042434
  %v39 = vsel %vm38, %v34, %v35
  %vm40 = vcmask 1041408
  %v41 = vsel %vm40, %v37, %v39
  %v43 = vlaneseq
  %vm44 = vcmp.ge.s32.totalorder %v43, 0
  %vm45 = vcmp.lt.s32.totalorder %v43, 512
  %vm46 = vmand %vm44, %vm45
  %47 = vst.msk [vmem:[%s3] sm:$0xf] %vm46, %v41
  // Predicated region
  $region14: #{batchnorm_conv.3} parent=0 // pred_check
    _
  $region15: #{batchnorm_conv.3} parent=0 // pred_check_branch
    %49 = sbr.rel (0) target = $region17
  $region16: #{batchnorm_conv.3} parent=0 // pred_region
    _
  $region17: #{batchnorm_conv.3} parent=0 // pred_fallthru
    _
  // Predicated region
  $region18: #{batchnorm_conv.3} parent=0 // pred_check
    _
  $region19: #{batchnorm_conv.3} parent=0 // pred_check_branch
    %51 = sbr.rel (0) target = $region21
  $region20: #{batchnorm_conv.3} parent=0 // pred_region
    _
  $region21: #{batchnorm_conv.3} parent=0 // pred_fallthru
    _

// kernel: batchnorm_conv.2
$region0: #{batchnorm_conv.2}
  #allocation0 [shape = 'u32[]', space=smem, size = 0x4, offset = 0x4, fixed_abs, tag = 'smem constant byte address 0x4 - core index']
  #allocation1 [shape = 'u32[72,128]{1,0:T(1,128)}', space=vmem, size = 0x9000, scoped, tag = 'internal scratch']
  #allocation2 [shape = 'bf16[16,40]{1,0:T(8,128)(2,1)}', space=vmem, size = 0x1000, scoped, tag = 'scratch operand']
  %s0 = inlined_call_operand.vmem [shape: bf16[2,20,8], index: 0, kind: input, shape index: {}]
  %s1 = inlined_call_operand.vmem [shape: bf16[40,16], index: 1, kind: input, shape index: {}]
  %s2 = inlined_call_operand.vmem [shape: bf16[2,16,16], index: 2, kind: output, shape index: {0}]
  %s3 = inlined_call_operand.vmem [shape: f32[2,1,16], index: 3, kind: output, shape index: {1}]
  %s4 = inlined_call_operand.vmem [shape: f32[2,1,16], index: 4, kind: output, shape index: {2}]
  %5 = xla_tuple %s2, %s3, %s4
  %s6 = sld [smem:[#allocation0]]
  $region61: #{batchnorm_conv.2} parent=0
    _
  %s8 = ssub.s32 1, %s6
  %s9 = scalar_select 0, %s8, %s6
  loop: start=0, step=1, limit=4
  $region2: #{batchnorm_conv.2} parent=0 // loop_pre_header
    _
  $region3: #{batchnorm_conv.2} parent=0 // loop_header
    %s11 = sphi 0, %s15
    %p12 = scmp.ge.s32.totalorder %s11, 4
    %s18 = sphi 0, %s30
    %s19 = sphi 0, %s26
    %s20 = sphi 0, %s18
    %s21 = sphi 0, %s19
    %s22 = sphi 0, %s20
    %s23 = sphi 0, %s21
    %s35 = sphi 0, %s37
    %s38 = sphi 0, %s35
    %s39 = sphi 0, %s38
    %s55 = sphi 0, %s39
    %s59 = sphi 0, %s59
    %s61 = sphi 0, %s59
    %s62 = sphi 0, %s61
    %s76 = sphi 0, %s62
    %s84 = sphi 0, %s86
    %s87 = sphi 0, %s84
    %s88 = sphi 0, %s87
    %s104 = sphi 0, %s88
    %s110 = sphi 0, %s112
    %s113 = sphi 0, %s110
    %s114 = sphi 0, %s113
    %s130 = sphi 0, %s114
    %s136 = sphi 0, %s138
    %s139 = sphi 0, %s136
    %s140 = sphi 0, %s139
    %s156 = sphi 0, %s140
  $region4: #{batchnorm_conv.2} parent=0 // loop_header_branch
    %14 = sbr.rel (%p12) target = $region8
  $region5: #{batchnorm_conv.2} parent=0 // loop_body
    %s16 = ssub.s32 %s11, 1
    %s17 = ssub.s32 %s11, 2
    %s24 = sadd.s32 1, %s19
    %p25 = scmp.ge.s32.totalorder %s24, 1
    %s26 = scalar_select %p25, 0, %s24
    %s27 = sadd.s32 1, %s18
    %s28 = scalar_select %p25, %s27, %s18
    %p29 = scmp.ge.s32.totalorder %s28, 2
    %s30 = scalar_select %p29, 0, %s28
    %s31 = sadd.s32 %s18, %s19
    %s32 = sadd.s32 %s30, %s26
    %s33 = ssub.s32 %s31, %s32
    %p34 = scmp.eq.s32.totalorder %s33, 0
    %s36 = sadd.s32 %s35, 1
    %s37 = scalar_select %p34, %s35, %s36
    %p40 = pneg %p34
    %p41 = scmp.eq.s32.totalorder %s11, 1
    %p42 = por %p40, %p41
    %p43 = scmp.ne.s32.totalorder %s35, %s38
    %p44 = scmp.eq.s32.totalorder %s11, 0
    %p45 = por %p43, %p44
    %p46 = scmp.ne.s32.totalorder %s35, %s38
    %p47 = scmp.eq.s32.totalorder %s16, 1
    %p48 = por %p46, %p47
    %p49 = scmp.ne.s32.totalorder %s38, %s39
    %p50 = scmp.eq.s32.totalorder %s16, 0
    %p51 = por %p49, %p50
    %p52 = scmp.ne.s32.totalorder %s38, %s39
    %p53 = scmp.eq.s32.totalorder %s17, 1
    %p54 = por %p52, %p53
    %p56 = scmp.ne.s32.totalorder %s39, %s55
    %p57 = scmp.eq.s32.totalorder %s17, 0
    %p58 = por %p56, %p57
    %s60 = sadd.s32 %s59, 1
    %p63 = scmp.eq.s32.totalorder %s11, 1
    %p64 = scmp.ne.s32.totalorder %s59, %s61
    %p65 = scmp.eq.s32.totalorder %s11, 0
    %p66 = por %p64, %p65
    %p67 = scmp.ne.s32.totalorder %s59, %s61
    %p68 = scmp.eq.s32.totalorder %s16, 1
    %p69 = por %p67, %p68
    %p70 = scmp.ne.s32.totalorder %s61, %s62
    %p71 = scmp.eq.s32.totalorder %s16, 0
    %p72 = por %p70, %p71
    %p73 = scmp.ne.s32.totalorder %s61, %s62
    %p74 = scmp.eq.s32.totalorder %s17, 1
    %p75 = por %p73, %p74
    %p77 = scmp.ne.s32.totalorder %s62, %s76
    %p78 = scmp.eq.s32.totalorder %s17, 0
    %p79 = por %p77, %p78
    %s80 = sadd.s32 %s18, %s19
    %s81 = sadd.s32 %s30, %s26
    %s82 = ssub.s32 %s80, %s81
    %p83 = scmp.eq.s32.totalorder %s82, 0
    %s85 = sadd.s32 %s84, 1
    %s86 = scalar_select %p83, %s84, %s85
    %p89 = pneg %p83
    %p90 = scmp.eq.s32.totalorder %s11, 1
    %p91 = por %p89, %p90
    %p92 = scmp.ne.s32.totalorder %s84, %s87
    %p93 = scmp.eq.s32.totalorder %s11, 0
    %p94 = por %p92, %p93
    %p95 = scmp.ne.s32.totalorder %s84, %s87
    %p96 = scmp.eq.s32.totalorder %s16, 1
    %p97 = por %p95, %p96
    %p98 = scmp.ne.s32.totalorder %s87, %s88
    %p99 = scmp.eq.s32.totalorder %s16, 0
    %p100 = por %p98, %p99
    %p101 = scmp.ne.s32.totalorder %s87, %s88
    %p102 = scmp.eq.s32.totalorder %s17, 1
    %p103 = por %p101, %p102
    %p105 = scmp.ne.s32.totalorder %s88, %s104
    %p106 = scmp.eq.s32.totalorder %s17, 0
    %p107 = por %p105, %p106
    %s108 = ssub.s32 %s18, %s30
    %p109 = scmp.eq.s32.totalorder %s108, 0
    %s111 = sadd.s32 %s110, 1
    %s112 = scalar_select %p109, %s110, %s111
    %p115 = pneg %p109
    %p116 = scmp.eq.s32.totalorder %s11, 1
    %p117 = por %p115, %p116
    %p118 = scmp.ne.s32.totalorder %s110, %s113
    %p119 = scmp.eq.s32.totalorder %s11, 0
    %p120 = por %p118, %p119
    %p121 = scmp.ne.s32.totalorder %s110, %s113
    %p122 = scmp.eq.s32.totalorder %s16, 1
    %p123 = por %p121, %p122
    %p124 = scmp.ne.s32.totalorder %s113, %s114
    %p125 = scmp.eq.s32.totalorder %s16, 0
    %p126 = por %p124, %p125
    %p127 = scmp.ne.s32.totalorder %s113, %s114
    %p128 = scmp.eq.s32.totalorder %s17, 1
    %p129 = por %p127, %p128
    %p131 = scmp.ne.s32.totalorder %s114, %s130
    %p132 = scmp.eq.s32.totalorder %s17, 0
    %p133 = por %p131, %p132
    %s134 = ssub.s32 %s18, %s30
    %p135 = scmp.eq.s32.totalorder %s134, 0
    %s137 = sadd.s32 %s136, 1
    %s138 = scalar_select %p135, %s136, %s137
    %p141 = pneg %p135
    %p142 = scmp.eq.s32.totalorder %s11, 1
    %p143 = por %p141, %p142
    %p144 = scmp.ne.s32.totalorder %s136, %s139
    %p145 = scmp.eq.s32.totalorder %s11, 0
    %p146 = por %p144, %p145
    %p147 = scmp.ne.s32.totalorder %s136, %s139
    %p148 = scmp.eq.s32.totalorder %s16, 1
    %p149 = por %p147, %p148
    %p150 = scmp.ne.s32.totalorder %s139, %s140
    %p151 = scmp.eq.s32.totalorder %s16, 0
    %p152 = por %p150, %p151
    %p153 = scmp.ne.s32.totalorder %s139, %s140
    %p154 = scmp.eq.s32.totalorder %s17, 1
    %p155 = por %p153, %p154
    %p157 = scmp.ne.s32.totalorder %s140, %s156
    %p158 = scmp.eq.s32.totalorder %s17, 0
    %p159 = por %p157, %p158
    %p160 = scmp.le.s32.totalorder 1, %s11
    %p161 = scmp.lt.s32.totalorder %s11, 3
    %p162 = pnand %p160, %p161
    %p163 = pneg %p162
    // Predicated region
    $region9: #{batchnorm_conv.2} parent=5 // pred_check
      _
    $region10: #{batchnorm_conv.2} parent=5 // pred_check_branch
      %165 = sbr.rel (%p162) target = $region12
    $region11: #{batchnorm_conv.2} parent=5 // pred_region
      %s166 = ssub.s32 %s11, 1
      // Predicated region
      $region13: #{batchnorm_conv.2} parent=11 // pred_check
        %p167 = pneg %p72
      $region14: #{batchnorm_conv.2} parent=11 // pred_check_branch
        %169 = sbr.rel (%p167) target = $region16
      $region15: #{batchnorm_conv.2} parent=11 // pred_region
        _
      $region16: #{batchnorm_conv.2} parent=11 // pred_fallthru
        _
    $region12: #{batchnorm_conv.2} parent=5 // pred_fallthru
      _
    %p170 = scmp.lt.s32.totalorder %s11, 2
    // Predicated region
    $region17: #{batchnorm_conv.2} parent=5 // pred_check
      %p171 = pneg %p170
    $region18: #{batchnorm_conv.2} parent=5 // pred_check_branch
      %173 = sbr.rel (%p171) target = $region20
    $region19: #{batchnorm_conv.2} parent=5 // pred_region
      // Predicated region
      $region21: #{batchnorm_conv.2} parent=19 // pred_check
        %p174 = pneg %p45
      $region22: #{batchnorm_conv.2} parent=19 // pred_check_branch
        %176 = sbr.rel (%p174) target = $region24
      $region23: #{batchnorm_conv.2} parent=19 // pred_region
        %s177 = sadd.s32 %s18, %s19
        %p178 = scmp.lt.s32.totalorder %s177, 1
        %s179 = scalar_select %p178, %s177, 1
        %s180 = smul.addr %s179, 3
        %s181 = smul.addr %s180, 4
        %s182 = scalar_lea.vmem %s0, %s181
        %s183 = sadd.s32 %s18, %s19
      $region24: #{batchnorm_conv.2} parent=19 // pred_fallthru
        _
    $region20: #{batchnorm_conv.2} parent=5 // pred_fallthru
      _
    %p184 = scmp.le.s32.totalorder 1, %s11
    %p185 = scmp.lt.s32.totalorder %s11, 3
    %p186 = pnand %p184, %p185
    %p187 = pneg %p186
    // Predicated region
    $region25: #{batchnorm_conv.2} parent=5 // pred_check
      _
    $region26: #{batchnorm_conv.2} parent=5 // pred_check_branch
      %189 = sbr.rel (%p186) target = $region28
    $region27: #{batchnorm_conv.2} parent=5 // pred_region
      %s190 = ssub.s32 %s11, 1
      %s191 = sadd.s32 %s20, %s21
      %p192 = scmp.lt.s32.totalorder %s191, 1
      %s193 = scalar_select %p192, %s191, 1
      %s194 = smul.addr %s193, 3
      %s195 = smul.addr %s194, 4
      %s196 = scalar_lea.vmem %s0, %s195
      %p197 = pneg %p51
      %p198 = pneg %p48
      %p199 = pneg %p72
      %p200 = pneg %p69
      %p201 = pneg %p100
      %p202 = pneg %p97
      %s203 = sadd.s32 %s20, %s21
      %p204 = scmp.lt.s32.totalorder %s203, 1
      %s205 = scalar_select %p204, %s203, 1
      %s206 = smul.addr %s205, 2
      %s207 = smul.addr %s206, 4
      %s208 = scalar_lea.vmem %s2, %s207
      %p209 = pneg %p126
      %p210 = pneg %p123
      %p211 = scmp.lt.s32.totalorder %s20, 1
      %s212 = scalar_select %p211, %s20, 1
      %s213 = scalar_lea.vmem %s3, %s212
      %p214 = pneg %p152
      %p215 = pneg %p149
      %p216 = scmp.lt.s32.totalorder %s20, 1
      %s217 = scalar_select %p216, %s20, 1
      %s218 = scalar_lea.vmem %s4, %s217
      %s219 = sadd.s32 %s20, %s21
      %p220 = scmp.lt.s32.totalorder %s219, 1
      %s221 = scalar_select %p220, %s219, 1
      %s222 = smul.addr %s221, 3
      %s223 = smul.addr %s222, 4
      %s224 = scalar_lea.vmem %s0, %s223
      %s225 = sadd.s32 %s20, %s21
      %s226 = sadd.s32 %s20, %s21
      %p227 = scmp.lt.s32.totalorder %s226, 1
      %s228 = scalar_select %p227, %s226, 1
      %s229 = smul.addr %s228, 2
      %s230 = smul.addr %s229, 4
      %s231 = scalar_lea.vmem %s2, %s230
      %s232 = sadd.s32 %s20, %s21
      %p233 = scmp.lt.s32.totalorder %s20, 1
      %s234 = scalar_select %p233, %s20, 1
      %s235 = scalar_lea.vmem %s3, %s234
      %p236 = scmp.lt.s32.totalorder %s20, 1
      %s237 = scalar_select %p236, %s20, 1
      %s238 = scalar_lea.vmem %s4, %s237
      %v240 = vld [vmem:[%s224] sm:$0xf]
      %v241 = vld [vmem:[%s224 + $0x4] sm:$0xf]
      %v242 = vld [vmem:[%s224 + $0x8] sm:$0x3]
      %vm243 = vcmask 60416
      %244 = vst.msk [vmem:[#allocation2] sm:$0xf] %vm243, %v240
      %245 = vst.msk [vmem:[#allocation2 + $0x4] sm:$0xf] %vm243, %v241
      %vm246 = vsmask.f32 3328
      %vm247 = vsmask.f32 7440
      %vm248 = vmor %vm246, %vm247
      %v250 = vshrl.u32 %v240, 16
      %v252 = vrot.slane %v250, 4
      %v253 = vshll.u32 %v240, 16
      %v255 = vrot.slane %v253, 5
      %v256 = vor.u32 %v252, %v255
      %v257 = vrot.slane %v256, 4
      %v259 = vshll.u32 %v241, 16
      %v261 = vrot.slane %v259, 5
      %v262 = vsel %vm248, %v257, %v261
      %v263 = vshrl.u32 %v241, 16
      %v265 = vrot.slane %v263, 4
      %v266 = vor.u32 %v265, %v261
      %v267 = vrot.slane %v266, 4
      %v269 = vshll.u32 %v242, 16
      %v271 = vrot.slane %v269, 5
      %v272 = vsel %vm248, %v267, %v271
      %273 = vrot.lane.b32.xlu0 %v262, 8
      %v274 = vpop.permute.xlu0 %273
      %275 = vrot.lane.b32.xlu0 %v272, 8
      %v276 = vpop.permute.xlu0 %275
      %vm279 = vcmask 126016
      %280 = vst.msk [vmem:[#allocation2] sm:$0xf] %vm279, %v274
      %281 = vst.msk [vmem:[#allocation2 + $0x4] sm:$0xf] %vm279, %v276
      %vm285 = vcmask 1042432
      %vm286 = vcmask 1046532
      %vm287 = vmor %vm285, %vm286
      %v288 = vrot.slane %v240, 5
      %v289 = vrot.slane %v288, 4
      %v290 = vrot.slane %v241, 5
      %v291 = vsel %vm287, %v289, %v290
      %v292 = vrot.slane %v290, 4
      %v293 = vrot.slane %v242, 5
      %v294 = vsel %vm287, %v292, %v293
      %295 = vrot.lane.b32.xlu0 %v291, 16
      %v296 = vpop.permute.xlu0 %295
      %297 = vrot.lane.b32.xlu0 %v294, 16
      %v298 = vpop.permute.xlu0 %297
      %vm301 = vcmask 191616
      %302 = vst.msk [vmem:[#allocation2] sm:$0xf] %vm301, %v296
      %303 = vst.msk [vmem:[#allocation2 + $0x4] sm:$0xf] %vm301, %v298
      %vm304 = vsmask.f32 2304
      %vm305 = vsmask.f32 6416
      %vm306 = vmor %vm304, %vm305
      %v307 = vrot.slane %v250, 5
      %v308 = vrot.slane %v253, 6
      %v309 = vor.u32 %v307, %v308
      %v310 = vrot.slane %v309, 4
      %v311 = vrot.slane %v263, 5
      %v312 = vrot.slane %v259, 6
      %v313 = vor.u32 %v311, %v312
      %v314 = vsel %vm306, %v310, %v313
      %v315 = vrot.slane %v313, 4
      %v316 = vshrl.u32 %v242, 16
      %v318 = vrot.slane %v316, 5
      %v319 = vrot.slane %v269, 6
      %v320 = vor.u32 %v318, %v319
      %v321 = vsel %vm306, %v315, %v320
      %322 = vrot.lane.b32.xlu0 %v314, 24
      %v323 = vpop.permute.xlu0 %322
      %324 = vrot.lane.b32.xlu0 %v321, 24
      %v325 = vpop.permute.xlu0 %324
      %vm328 = vcmask 257216
      %329 = vst.msk [vmem:[#allocation2] sm:$0xf] %vm328, %v323
      %330 = vst.msk [vmem:[#allocation2 + $0x4] sm:$0xf] %vm328, %v325
      %vm331 = vcmask 1041408
      %vm332 = vcmask 1045508
      %vm333 = vmor %vm331, %vm332
      %v334 = vrot.slane %v240, 6
      %v335 = vrot.slane %v334, 4
      %v336 = vrot.slane %v241, 6
      %v337 = vsel %vm333, %v335, %v336
      %v338 = vrot.slane %v336, 4
      %v339 = vrot.slane %v242, 6
      %v340 = vsel %vm333, %v338, %v339
      %341 = vrot.lane.b32.xlu0 %v337, 32
      %v342 = vpop.permute.xlu0 %341
      %343 = vrot.lane.b32.xlu0 %v340, 32
      %v344 = vpop.permute.xlu0 %343
      %vm347 = vcmask 322816
      %348 = vst.msk [vmem:[#allocation2] sm:$0xf] %vm347, %v342
      %349 = vst.msk [vmem:[#allocation2 + $0x4] sm:$0xf] %vm347, %v344
      %v350 = vld [vmem:[#allocation2] sm:$0xf]
      %v351 = vld [vmem:[#allocation2 + $0x4] sm:$0xf]
      %v352 = vld [vmem:[%s1] sm:$0xf]
      %v353 = vld [vmem:[%s1 + $0x4] sm:$0xf]
      %v354 = vld [vmem:[%s1 + $0x8] sm:$0xf]
      %v355 = vld [vmem:[%s1 + $0xc] sm:$0xf]
      %v356 = vld [vmem:[%s1 + $0x10] sm:$0xf]
      %v359 = vunpack.c.l.b16 %v350
      %v360 = vunpack.c.l.b16 %v351
      %v361 = vpack.c.b16 %v360, %v359
      %v367 = vunpack.c.l.b16 %v352
      %v368 = vunpack.c.l.b16 %v353
      %v369 = vunpack.c.l.b16 %v354
      %v370 = vunpack.c.l.b16 %v355
      %v371 = vunpack.c.l.b16 %v356
      %v372 = vpack.c.b16 %v368, %v367
      %v373 = vpack.c.b16 %v370, %v369
      %v374 = vpack.c.b16 %v371, %v371
      %vm377 = vcmask 326656
      %v379 = vsel %vm377, %v361, 0
      %vm381 = vcmask 1043456
      %v383 = vsel %vm381, %v374, 0
      %385 = vmatpush.bf16.msra.mxu0 0
      %386 = vmatpush.bf16.msra.mxu0 0
      %387 = vmatpush.bf16.msra.mxu0 0
      %388 = vmatpush.bf16.msra.mxu0 0
      %389 = vmatpush.bf16.msra.mxu0 0
      %390 = vmatpush.bf16.msra.mxu0 %v383
      %391 = vmatpush.bf16.msra.mxu0 %v373
      %392 = vmatpush.bf16.msra.mxu0 %v372
      %393 = vmatmul.bf16.gmra.mxu0 %v379
      %v394 = vpop.f32.mrf.mxu0
      %v395 = vadd.f32 0.0, %v394
      %v396 = vpop.f32.mrf.mxu0
      %v397 = vadd.f32 0.0, %v396
      %398 = vdwg.mxu0
      %v399 = vmax.f32 %v395, 0.0
      %v400 = vmax.f32 %v397, 0.0
      %v401 = vpack.c.bf16 %v399, %v399
      %v402 = vpack.c.bf16 %v400, %v400
      %vm403 = vcmask 125952
      %404 = vst.msk [vmem:[%s231] sm:$0xf] %vm403, %v401
      %405 = vst.msk [vmem:[%s231 + $0x4] sm:$0xf] %vm403, %v402
      %p406 = scmp.eq.s32.totalorder %s21, 0
      // Predicated region
      $region29: #{batchnorm_conv.2} parent=27 // pred_check
        %p407 = pneg %p406
      $region30: #{batchnorm_conv.2} parent=27 // pred_check_branch
        %409 = sbr.rel (%p407) target = $region32
      $region31: #{batchnorm_conv.2} parent=27 // pred_region
        %vm410 = vcmask 122880
        %411 = vst.msk [vmem:[%s235] sm:$0x1] %vm410, 0.0
        %412 = vst.msk [vmem:[%s238] sm:$0x1] %vm410, 0.0
      $region32: #{batchnorm_conv.2} parent=27 // pred_fallthru
        _
      %v413 = vld [vmem:[%s235] sm:$0x1]
      %vm414 = vcmask 130048
      %v415 = vsel %vm414, %v399, 0.0
      %v416 = vsel %vm414, %v400, 0.0
      %v417 = vadd.f32 %v415, %v416
      %v418 = vrot.slane %v417, 4
      %v419 = vadd.f32 %v417, %v418
      %v420 = vrot.slane %v419, 2
      %v421 = vadd.f32 %v419, %v420
      %v422 = vrot.slane %v421, 1
      %v423 = vadd.f32 %v421, %v422
      %v424 = vadd.f32 %v413, %v423
      %vm425 = vcmask 122880
      %426 = vst.msk [vmem:[%s235] sm:$0x1] %vm425, %v424
      %v427 = vld [vmem:[%s238] sm:$0x1]
      %v428 = vmul.f32 %v399, %v399
      %v429 = vmul.f32 %v400, %v400
      %v430 = vsel %vm414, %v428, 0.0
      %v431 = vsel %vm414, %v429, 0.0
      %v432 = vadd.f32 %v430, %v431
      %v433 = vrot.slane %v432, 4
      %v434 = vadd.f32 %v432, %v433
      %v435 = vrot.slane %v434, 2
      %v436 = vadd.f32 %v434, %v435
      %v437 = vrot.slane %v436, 1
      %v438 = vadd.f32 %v436, %v437
      %v439 = vadd.f32 %v427, %v438
      %440 = vst.msk [vmem:[%s238] sm:$0x1] %vm425, %v439
      %s441 = sadd.s32 %s20, %s21
      %p442 = scmp.lt.s32.totalorder %s441, 1
      %s443 = scalar_select %p442, %s441, 1
      %s444 = smul.addr %s443, 2
      %s445 = smul.addr %s444, 4
      %s446 = scalar_lea.vmem %s2, %s445
      %p447 = scmp.lt.s32.totalorder %s20, 1
      %s448 = scalar_select %p447, %s20, 1
      %s449 = scalar_lea.vmem %s3, %s448
      %p450 = scmp.lt.s32.totalorder %s20, 1
      %s451 = scalar_select %p450, %s20, 1
      %s452 = scalar_lea.vmem %s4, %s451
      // Predicated region
      $region33: #{batchnorm_conv.2} parent=27 // pred_check
        %p453 = pneg %p97
      $region34: #{batchnorm_conv.2} parent=27 // pred_check_branch
        %455 = sbr.rel (%p453) target = $region36
      $region35: #{batchnorm_conv.2} parent=27 // pred_region
        %s456 = sadd.s32 %s20, %s21
      $region36: #{batchnorm_conv.2} parent=27 // pred_fallthru
        _
      // Predicated region
      $region37: #{batchnorm_conv.2} parent=27 // pred_check
        %p457 = pneg %p123
      $region38: #{batchnorm_conv.2} parent=27 // pred_check_branch
        %459 = sbr.rel (%p457) target = $region40
      $region39: #{batchnorm_conv.2} parent=27 // pred_region
        _
      $region40: #{batchnorm_conv.2} parent=27 // pred_fallthru
        _
      // Predicated region
      $region41: #{batchnorm_conv.2} parent=27 // pred_check
        %p460 = pneg %p149
      $region42: #{batchnorm_conv.2} parent=27 // pred_check_branch
        %462 = sbr.rel (%p460) target = $region44
      $region43: #{batchnorm_conv.2} parent=27 // pred_region
        _
      $region44: #{batchnorm_conv.2} parent=27 // pred_fallthru
        _
    $region28: #{batchnorm_conv.2} parent=5 // pred_fallthru
      _
    %p463 = scmp.le.s32.totalorder 2, %s11
    // Predicated region
    $region45: #{batchnorm_conv.2} parent=5 // pred_check
      %p464 = pneg %p463
    $region46: #{batchnorm_conv.2} parent=5 // pred_check_branch
      %466 = sbr.rel (%p464) target = $region48
    $region47: #{batchnorm_conv.2} parent=5 // pred_region
      %s467 = ssub.s32 %s11, 2
      // Predicated region
      $region49: #{batchnorm_conv.2} parent=47 // pred_check
        %p468 = pneg %p103
      $region50: #{batchnorm_conv.2} parent=47 // pred_check_branch
        %470 = sbr.rel (%p468) target = $region52
      $region51: #{batchnorm_conv.2} parent=47 // pred_region
        %s471 = sadd.s32 %s22, %s23
        %p472 = scmp.lt.s32.totalorder %s471, 1
        %s473 = scalar_select %p472, %s471, 1
        %s474 = smul.addr %s473, 2
        %s475 = smul.addr %s474, 4
        %s476 = scalar_lea.vmem %s2, %s475
      $region52: #{batchnorm_conv.2} parent=47 // pred_fallthru
        _
      // Predicated region
      $region53: #{batchnorm_conv.2} parent=47 // pred_check
        %p477 = pneg %p129
      $region54: #{batchnorm_conv.2} parent=47 // pred_check_branch
        %479 = sbr.rel (%p477) target = $region56
      $region55: #{batchnorm_conv.2} parent=47 // pred_region
        %p480 = scmp.lt.s32.totalorder %s22, 1
        %s481 = scalar_select %p480, %s22, 1
        %s482 = scalar_lea.vmem %s3, %s481
      $region56: #{batchnorm_conv.2} parent=47 // pred_fallthru
        _
      // Predicated region
      $region57: #{batchnorm_conv.2} parent=47 // pred_check
        %p483 = pneg %p155
      $region58: #{batchnorm_conv.2} parent=47 // pred_check_branch
        %485 = sbr.rel (%p483) target = $region60
      $region59: #{batchnorm_conv.2} parent=47 // pred_region
        %p486 = scmp.lt.s32.totalorder %s22, 1
        %s487 = scalar_select %p486, %s22, 1
        %s488 = scalar_lea.vmem %s4, %s487
      $region60: #{batchnorm_conv.2} parent=47 // pred_fallthru
        _
    $region48: #{batchnorm_conv.2} parent=5 // pred_fallthru
      _
  $region6: #{batchnorm_conv.2} parent=0 // loop_footer
    %s15 = sadd.s32 1, %s11
  $region7: #{batchnorm_conv.2} parent=0 // loop_footer_branch
    %10 = sbr.rel target = $region3
  $region8: #{batchnorm_conv.2} parent=0 // loop_exit
    _

</llo_original>
